<compile_context>
chip_gen: v7x
topology: tpu7x:2x2x1
jax: 0.10.0
libtpu: 0.0.40
codegen_flags: <defaults>
</compile_context>

<pallas_src>
import functools

import numpy as np
import jax
import jax.numpy as jnp
from jax import lax
from jax.experimental import pallas as pl
from jax.experimental.pallas import tpu as pltpu


def _round_up(n, m):
    return ((n + m - 1) // m) * m


def _layout(obs_dim, hidden_dim, n_actions):
    """Row/lane layout of the packed parameter slab (all offsets 8/128 aligned)."""
    H = hidden_dim
    Lh = _round_up(H, 128)           # lane width of x / h / each gate group
    Lq = _round_up(n_actions, 128)   # lane width of the padded q slab
    L = max(4 * Lh, Lq)              # slab lane width (gates need 4 groups)
    off_w1 = 0
    off_b1 = _round_up(obs_dim, 8)
    off_wx = off_b1 + 8
    off_wh = off_wx + Lh
    off_bg = off_wh + Lh
    off_w2 = off_bg + 8
    off_b2 = off_w2 + Lh
    rows = off_b2 + 8
    return dict(H=H, Lh=Lh, Lq=Lq, L=L, rows=rows,
                w1=off_w1, b1=off_b1, wx=off_wx, wh=off_wh,
                bg=off_bg, w2=off_w2, b2=off_b2)


def pack_params(p, obs_dim, hidden_dim, n_actions, dtype=jnp.float32):
    """Pack logical params (transposed weights, PyTorch gate order r,z,n) into one slab."""
    lay = _layout(obs_dim, hidden_dim, n_actions)
    H, Lh, L, rows = lay["H"], lay["Lh"], lay["L"], lay["rows"]

    slab = np.zeros((rows, L), np.float32)

    # fc1 (lanes >= H are zero -> x's padded lanes stay exactly 0 after ReLU)
    slab[lay["w1"]:lay["w1"] + obs_dim, 0:H] = np.asarray(p["w1"])
    slab[lay["b1"], 0:H] = np.asarray(p["b1"])[0]

    w_ih = np.asarray(p["w_ih"])   # (3, H, H) gate order r, z, n  (input path)
    w_hh = np.asarray(p["w_hh"])   # (3, H, H)                     (hidden path)
    b_ih = np.asarray(p["b_ih"])   # (3, 1, H)
    b_hh = np.asarray(p["b_hh"])

    # Gate column groups, each 128-lane aligned: [ r | z | i_n | h_n ]
    slab[lay["wx"]:lay["wx"] + H, 0 * Lh:0 * Lh + H] = w_ih[0]   # x -> r
    slab[lay["wx"]:lay["wx"] + H, 1 * Lh:1 * Lh + H] = w_ih[1]   # x -> z
    slab[lay["wx"]:lay["wx"] + H, 2 * Lh:2 * Lh + H] = w_ih[2]   # x -> i_n
    slab[lay["wh"]:lay["wh"] + H, 0 * Lh:0 * Lh + H] = w_hh[0]   # h -> r
    slab[lay["wh"]:lay["wh"] + H, 1 * Lh:1 * Lh + H] = w_hh[1]   # h -> z
    slab[lay["wh"]:lay["wh"] + H, 3 * Lh:3 * Lh + H] = w_hh[2]   # h -> h_n

    slab[lay["bg"], 0 * Lh:0 * Lh + H] = b_ih[0, 0] + b_hh[0, 0]   # r bias (pre-summed)
    slab[lay["bg"], 1 * Lh:1 * Lh + H] = b_ih[1, 0] + b_hh[1, 0]   # z bias (pre-summed)
    slab[lay["bg"], 2 * Lh:2 * Lh + H] = b_ih[2, 0]                # b_in
    slab[lay["bg"], 3 * Lh:3 * Lh + H] = b_hh[2, 0]                # b_hn (gets scaled by r)

    # fc2 (padded lanes zero -> lane-dense q slab stores zeros in padded columns)
    slab[lay["w2"]:lay["w2"] + H, 0:n_actions] = np.asarray(p["w2"])
    slab[lay["b2"], 0:n_actions] = np.asarray(p["b2"])[0]

    return jnp.asarray(slab, dtype)


def make_qmix_forward(obs_dim, hidden_dim, n_actions, max_b_tile=256):
    lay = _layout(obs_dim, hidden_dim, n_actions)
    H, Lh, Lq, L, rows = lay["H"], lay["Lh"], lay["Lq"], lay["L"], lay["rows"]

    def kernel(obs_ref, h0_ref, p_ref, q_ref, hout_ref):
        t = pl.program_id(1)

        # Initialize the VMEM-resident h carry (the revisited output block) at t == 0.
        @pl.when(t == 0)
        def _():
            hout_ref[...] = h0_ref[...]

        h = hout_ref[...]                      # (TB, Lh) f32, padded lanes == 0
        obs = obs_ref[...]                     # (TB, obs_dim)
        cd = p_ref.dtype                       # matmul operand dtype (f32 or bf16)

        # ---- fc1 + ReLU (lane-dense (TB, Lh); padded lanes stay exactly 0)
        w1 = p_ref[lay["w1"]:lay["w1"] + obs_dim, 0:Lh]
        b1 = p_ref[lay["b1"]:lay["b1"] + 1, 0:Lh]
        x = jnp.dot(obs.astype(cd), w1, preferred_element_type=jnp.float32)
        x = jnp.maximum(x + b1.astype(jnp.float32), 0.0)

        # ---- GRUCell: gates = x @ Wx + h @ Wh + bg   (no concat, no sub-vreg slices)
        wx = p_ref[lay["wx"]:lay["wx"] + Lh, :]
        wh = p_ref[lay["wh"]:lay["wh"] + Lh, :]
        bg = p_ref[lay["bg"]:lay["bg"] + 1, :]
        gates = (jnp.dot(x.astype(cd), wx, preferred_element_type=jnp.float32)
                 + jnp.dot(h.astype(cd), wh, preferred_element_type=jnp.float32)
                 + bg.astype(jnp.float32))      # (TB, 4*Lh) f32

        r = jax.nn.sigmoid(gates[:, 0 * Lh:1 * Lh])
        z = jax.nn.sigmoid(gates[:, 1 * Lh:2 * Lh])
        i_n = gates[:, 2 * Lh:3 * Lh]           # x W_in + b_in
        h_n = gates[:, 3 * Lh:4 * Lh]           # h W_hn + b_hn
        n = jnp.tanh(i_n + r * h_n)
        h_new = (1.0 - z) * n + z * h           # padded lanes stay exactly 0

        hout_ref[...] = h_new                   # carry for next timestep

        # ---- fc2 -> lane-dense padded q slab (unmasked stores)
        w2 = p_ref[lay["w2"]:lay["w2"] + Lh, 0:Lq]
        b2 = p_ref[lay["b2"]:lay["b2"] + 1, 0:Lq]
        q = jnp.dot(h_new.astype(cd), w2, preferred_element_type=jnp.float32)
        q_ref[...] = (q + b2.astype(jnp.float32)).astype(q_ref.dtype)

    @jax.jit
    def forward(obs_seq, hidden_state, packed):
        """obs_seq: (T, B, obs_dim), hidden_state: (B, H) -> (q: (T,B,A), h: (B,H))."""
        T, B, od = obs_seq.shape
        tb = max_b_tile if B >= max_b_tile else _round_up(B, 8)
        B_pad = _round_up(B, tb)

        obs_p = jnp.pad(obs_seq, ((0, 0), (0, B_pad - B), (0, 0)))
        h0_p = jnp.pad(hidden_state.astype(jnp.float32),
                       ((0, B_pad - B), (0, Lh - H)))

        q_pad, h_pad = pl.pallas_call(
            kernel,
            out_shape=(
                jax.ShapeDtypeStruct((T, B_pad, Lq), jnp.float32),
                jax.ShapeDtypeStruct((B_pad, Lh), jnp.float32),
            ),
            grid_spec=pltpu.PrefetchScalarGridSpec(
                num_scalar_prefetch=0,
                grid=(B_pad // tb, T),
                in_specs=[
                    pl.BlockSpec((None, tb, od), lambda b, t: (t, b, 0)),
                    pl.BlockSpec((tb, Lh), lambda b, t: (b, 0)),
                    pl.BlockSpec((rows, L), lambda b, t: (0, 0)),   # params: fetched once
                ],
                out_specs=(
                    pl.BlockSpec((None, tb, Lq), lambda b, t: (t, b, 0)),
                    pl.BlockSpec((tb, Lh), lambda b, t: (b, 0)),    # revisited -> h carry
                ),
            ),
            compiler_params=pltpu.CompilerParams(
                dimension_semantics=("parallel", "arbitrary")),
            input_output_aliases={1: 1},   # h0 (a jit-internal temp) -> h_out, no copy
        )(obs_p, h0_p, packed)

        return q_pad[:, :B, :n_actions], h_pad[:B, :H]

    return forward


# ----------------------------- test harness ---------------------------------

def init_params(key, obs_dim, hidden_dim, n_actions):
    ks = jax.random.split(key, 8)
    scale = 0.1
    return {
        "w1": scale * jax.random.normal(ks[0], (obs_dim, hidden_dim), jnp.float32),
        "b1": scale * jax.random.normal(ks[1], (1, hidden_dim), jnp.float32),
        "w_ih": scale * jax.random.normal(ks[2], (3, hidden_dim, hidden_dim), jnp.float32),
        "w_hh": scale * jax.random.normal(ks[3], (3, hidden_dim, hidden_dim), jnp.float32),
        "b_ih": scale * jax.random.normal(ks[4], (3, 1, hidden_dim), jnp.float32),
        "b_hh": scale * jax.random.normal(ks[5], (3, 1, hidden_dim), jnp.float32),
        "w2": scale * jax.random.normal(ks[6], (hidden_dim, n_actions), jnp.float32),
        "b2": scale * jax.random.normal(ks[7], (1, n_actions), jnp.float32),
    }


def reference_forward_seq(obs_seq, h0, p):
    """Pure-JAX PyTorch-semantics reference: scan of fc1 -> ReLU -> GRUCell -> fc2."""
    dot = functools.partial(jnp.dot, precision=lax.Precision.HIGHEST)

    def step(h, obs):
        x = jnp.maximum(dot(obs, p["w1"]) + p["b1"], 0.0)
        i_r = dot(x, p["w_ih"][0]) + p["b_ih"][0]
        i_z = dot(x, p["w_ih"][1]) + p["b_ih"][1]
        i_n = dot(x, p["w_ih"][2]) + p["b_ih"][2]
        h_r = dot(h, p["w_hh"][0]) + p["b_hh"][0]
        h_z = dot(h, p["w_hh"][1]) + p["b_hh"][1]
        h_n = dot(h, p["w_hh"][2]) + p["b_hh"][2]
        r = jax.nn.sigmoid(i_r + h_r)
        z = jax.nn.sigmoid(i_z + h_z)
        n = jnp.tanh(i_n + r * h_n)
        h_new = (1.0 - z) * n + z * h
        q = dot(h_new, p["w2"]) + p["b2"]
        return h_new, q

    h_last, qs = lax.scan(step, h0, obs_seq)
    return qs, h_last


if __name__ == "__main__":
    # Small shapes: rollout length T=8, batch (agents*envs)=8, obs=16, H=32, A=8.
    T, B, obs_dim, hidden_dim, n_actions = 8, 8, 16, 32, 8

    key = jax.random.PRNGKey(0)
    k_obs, k_h, k_params = jax.random.split(key, 3)

    obs_seq = jax.random.normal(k_obs, (T, B, obs_dim), jnp.float32)
    hidden_state = jax.random.normal(k_h, (B, hidden_dim), jnp.float32)
    params = init_params(k_params, obs_dim, hidden_dim, n_actions)

    q_ref, h_ref = reference_forward_seq(obs_seq, hidden_state, params)

    forward = make_qmix_forward(obs_dim, hidden_dim, n_actions)

    # f32 weight slab: tight check.
    packed_f32 = pack_params(params, obs_dim, hidden_dim, n_actions, jnp.float32)
    q, h_new = jax.block_until_ready(forward(obs_seq, hidden_state, packed_f32))
    np.testing.assert_allclose(np.asarray(q), np.asarray(q_ref), rtol=1e-4, atol=1e-4)
    np.testing.assert_allclose(np.asarray(h_new), np.asarray(h_ref), rtol=1e-4, atol=1e-4)

    # bf16 weight slab (v6e/v7x path): bf16 MXU operands, f32 accumulation/elementwise.
    packed_bf16 = pack_params(params, obs_dim, hidden_dim, n_actions, jnp.bfloat16)
    q16, h16 = jax.block_until_ready(forward(obs_seq, hidden_state, packed_bf16))
    np.testing.assert_allclose(np.asarray(q16), np.asarray(q_ref), rtol=5e-2, atol=5e-2)
    np.testing.assert_allclose(np.asarray(h16), np.asarray(h_ref), rtol=5e-2, atol=5e-2)

    # TODO(synk): get_random_action is a host-side numpy RNG helper, not part of forward.
    print("KERNEL_OK")
</pallas_src>

<mosaic_0001>
module attributes {stable_mosaic.version = 11 : i64} {
  func.func @kernel(%arg0: i32, %arg1: i32, %arg2: memref<1x8x16xf32, #tpu.memory_space<vmem>>, %arg3: memref<8x128xf32, #tpu.memory_space<vmem>>, %arg4: memref<424x512xf32, #tpu.memory_space<vmem>>, %arg5: memref<1x8x128xf32, #tpu.memory_space<vmem>>, %arg6: memref<8x128xf32, #tpu.memory_space<vmem>>) attributes {dimension_semantics = [#tpu.dimension_semantics<parallel>, #tpu.dimension_semantics<arbitrary>], iteration_bounds = array<i64: 1, 8>, scalar_prefetch = 0 : i64, scratch_operands = 0 : i64, tpu.core_type = #tpu.core_type<tc>, window_params = [{transform_indices = @transform_0, window_bounds = array<i64: 1, 8, 16>}, {transform_indices = @transform_1, window_bounds = array<i64: 8, 128>}, {pipeline_mode = #tpu.pipeline_mode<synchronous>, transform_indices = @transform_2, window_bounds = array<i64: 424, 512>}, {transform_indices = @transform_3, window_bounds = array<i64: 1, 8, 128>}, {transform_indices = @transform_4, window_bounds = array<i64: 8, 128>}]} {
    %c0_i32 = arith.constant 0 : i32
    %0 = arith.cmpi eq, %arg1, %c0_i32 : i32
    %1 = arith.extui %0 : i1 to i32
    %c0_i32_0 = arith.constant 0 : i32
    %2 = arith.cmpi ne, %1, %c0_i32_0 : i32
    scf.if %2 {
      %c0_25 = arith.constant 0 : index
      %c0_26 = arith.constant 0 : index
      %52 = vector.load %arg3[%c0_25, %c0_26] : memref<8x128xf32, #tpu.memory_space<vmem>>, vector<8x128xf32>
      %c0_27 = arith.constant 0 : index
      %c0_28 = arith.constant 0 : index
      %53 = vector.load %arg6[%c0_27, %c0_28] : memref<8x128xf32, #tpu.memory_space<vmem>>, vector<8x128xf32>
      tpu.vector_store %arg6[%c0_27, %c0_28], %52 {strides = array<i32>} : memref<8x128xf32, #tpu.memory_space<vmem>>, vector<8x128xf32>,
    } else {
    }
    %c0 = arith.constant 0 : index
    %c0_1 = arith.constant 0 : index
    %3 = vector.load %arg6[%c0, %c0_1] : memref<8x128xf32, #tpu.memory_space<vmem>>, vector<8x128xf32>
    %c0_2 = arith.constant 0 : index
    %c0_3 = arith.constant 0 : index
    %c0_4 = arith.constant 0 : index
    %4 = vector.load %arg2[%c0_2, %c0_3, %c0_4] : memref<1x8x16xf32, #tpu.memory_space<vmem>>, vector<1x8x16xf32>
    %5 = vector.shape_cast %4 : vector<1x8x16xf32> to vector<8x16xf32>
    %c0_5 = arith.constant 0 : index
    %c0_6 = arith.constant 0 : index
    %6 = vector.load %arg4[%c0_5, %c0_6] : memref<424x512xf32, #tpu.memory_space<vmem>>, vector<16x128xf32>
    %c16 = arith.constant 16 : index
    %c0_7 = arith.constant 0 : index
    %7 = vector.load %arg4[%c16, %c0_7] : memref<424x512xf32, #tpu.memory_space<vmem>>, vector<1x128xf32>
    %cst = arith.constant dense<0.000000e+00> : vector<8x128xf32>
    %8 = tpu.matmul %5, %6, %cst {dimension_numbers = #tpu.dot_dimension_numbers<[1], [0], [0], [1], [0, 0, 1, 1], [], []>} : vector<8x16xf32>, vector<16x128xf32>, vector<8x128xf32> -> vector<8x128xf32>
    %9 = vector.broadcast %7 : vector<1x128xf32> to vector<8x128xf32>
    %10 = arith.addf %8, %9 : vector<8x128xf32>
    %cst_8 = arith.constant 0.000000e+00 : f32
    %11 = vector.broadcast %cst_8 : f32 to vector<8x128xf32>
    %12 = arith.maximumf %10, %11 : vector<8x128xf32>
    %c24 = arith.constant 24 : index
    %c0_9 = arith.constant 0 : index
    %13 = vector.load %arg4[%c24, %c0_9] : memref<424x512xf32, #tpu.memory_space<vmem>>, vector<128x512xf32>
    %c152 = arith.constant 152 : index
    %c0_10 = arith.constant 0 : index
    %14 = vector.load %arg4[%c152, %c0_10] : memref<424x512xf32, #tpu.memory_space<vmem>>, vector<128x512xf32>
    %c280 = arith.constant 280 : index
    %c0_11 = arith.constant 0 : index
    %15 = vector.load %arg4[%c280, %c0_11] : memref<424x512xf32, #tpu.memory_space<vmem>>, vector<1x512xf32>
    %cst_12 = arith.constant dense<0.000000e+00> : vector<8x512xf32>
    %16 = tpu.matmul %12, %13, %cst_12 {dimension_numbers = #tpu.dot_dimension_numbers<[1], [0], [0], [1], [0, 0, 1, 1], [], []>} : vector<8x128xf32>, vector<128x512xf32>, vector<8x512xf32> -> vector<8x512xf32>
    %cst_13 = arith.constant dense<0.000000e+00> : vector<8x512xf32>
    %17 = tpu.matmul %3, %14, %cst_13 {dimension_numbers = #tpu.dot_dimension_numbers<[1], [0], [0], [1], [0, 0, 1, 1], [], []>} : vector<8x128xf32>, vector<128x512xf32>, vector<8x512xf32> -> vector<8x512xf32>
    %18 = arith.addf %16, %17 : vector<8x512xf32>
    %19 = vector.broadcast %15 : vector<1x512xf32> to vector<8x512xf32>
    %20 = arith.addf %18, %19 : vector<8x512xf32>
    %21 = vector.extract_strided_slice %20 {offsets = [0, 0], sizes = [8, 128], strides = [1, 1]} : vector<8x512xf32> to vector<8x128xf32>
    %22 = arith.negf %21 : vector<8x128xf32>
    %23 = math.exp %22 : vector<8x128xf32>
    %cst_14 = arith.constant 1.000000e+00 : f32
    %24 = vector.broadcast %cst_14 : f32 to vector<8x128xf32>
    %25 = arith.addf %24, %23 : vector<8x128xf32>
    %26 = arith.divf %24, %25 : vector<8x128xf32>
    %27 = vector.extract_strided_slice %20 {offsets = [0, 128], sizes = [8, 128], strides = [1, 1]} : vector<8x512xf32> to vector<8x128xf32>
    %28 = arith.negf %27 : vector<8x128xf32>
    %29 = math.exp %28 : vector<8x128xf32>
    %cst_15 = arith.constant 1.000000e+00 : f32
    %30 = vector.broadcast %cst_15 : f32 to vector<8x128xf32>
    %31 = arith.addf %30, %29 : vector<8x128xf32>
    %32 = arith.divf %30, %31 : vector<8x128xf32>
    %33 = vector.extract_strided_slice %20 {offsets = [0, 256], sizes = [8, 128], strides = [1, 1]} : vector<8x512xf32> to vector<8x128xf32>
    %34 = vector.extract_strided_slice %20 {offsets = [0, 384], sizes = [8, 128], strides = [1, 1]} : vector<8x512xf32> to vector<8x128xf32>
    %35 = arith.mulf %26, %34 : vector<8x128xf32>
    %36 = arith.addf %33, %35 : vector<8x128xf32>
    %37 = math.tanh %36 : vector<8x128xf32>
    %cst_16 = arith.constant 1.000000e+00 : f32
    %38 = vector.broadcast %cst_16 : f32 to vector<8x128xf32>
    %39 = arith.subf %38, %32 : vector<8x128xf32>
    %40 = arith.mulf %39, %37 : vector<8x128xf32>
    %41 = arith.mulf %32, %3 : vector<8x128xf32>
    %42 = arith.addf %40, %41 : vector<8x128xf32>
    %c0_17 = arith.constant 0 : index
    %c0_18 = arith.constant 0 : index
    %43 = vector.load %arg6[%c0_17, %c0_18] : memref<8x128xf32, #tpu.memory_space<vmem>>, vector<8x128xf32>
    tpu.vector_store %arg6[%c0_17, %c0_18], %42 {strides = array<i32>} : memref<8x128xf32, #tpu.memory_space<vmem>>, vector<8x128xf32>,
    %c288 = arith.constant 288 : index
    %c0_19 = arith.constant 0 : index
    %44 = vector.load %arg4[%c288, %c0_19] : memref<424x512xf32, #tpu.memory_space<vmem>>, vector<128x128xf32>
    %c416 = arith.constant 416 : index
    %c0_20 = arith.constant 0 : index
    %45 = vector.load %arg4[%c416, %c0_20] : memref<424x512xf32, #tpu.memory_space<vmem>>, vector<1x128xf32>
    %cst_21 = arith.constant dense<0.000000e+00> : vector<8x128xf32>
    %46 = tpu.matmul %42, %44, %cst_21 {dimension_numbers = #tpu.dot_dimension_numbers<[1], [0], [0], [1], [0, 0, 1, 1], [], []>} : vector<8x128xf32>, vector<128x128xf32>, vector<8x128xf32> -> vector<8x128xf32>
    %47 = vector.broadcast %45 : vector<1x128xf32> to vector<8x128xf32>
    %48 = arith.addf %46, %47 : vector<8x128xf32>
    %c0_22 = arith.constant 0 : index
    %c0_23 = arith.constant 0 : index
    %c0_24 = arith.constant 0 : index
    %49 = vector.load %arg5[%c0_22, %c0_23, %c0_24] : memref<1x8x128xf32, #tpu.memory_space<vmem>>, vector<1x8x128xf32>
    %50 = vector.shape_cast %49 : vector<1x8x128xf32> to vector<8x128xf32>
    %51 = vector.shape_cast %48 : vector<8x128xf32> to vector<1x8x128xf32>
    tpu.vector_store %arg5[%c0_22, %c0_23, %c0_24], %51 {strides = array<i32>} : memref<1x8x128xf32, #tpu.memory_space<vmem>>, vector<1x8x128xf32>,
    return
  }
  func.func @transform_0(%arg0: i32, %arg1: i32) -> (i32, i32, i32) {
    %c0_i32 = arith.constant 0 : i32
    %c0_i32_0 = arith.constant 0 : i32
    return %arg1, %arg0, %c0_i32 : i32, i32, i32
  }
  func.func @transform_1(%arg0: i32, %arg1: i32) -> (i32, i32) {
    %c0_i32 = arith.constant 0 : i32
    %c0_i32_0 = arith.constant 0 : i32
    return %arg0, %c0_i32 : i32, i32
  }
  func.func @transform_2(%arg0: i32, %arg1: i32) -> (i32, i32) {
    %c0_i32 = arith.constant 0 : i32
    %c0_i32_0 = arith.constant 0 : i32
    %c0_i32_1 = arith.constant 0 : i32
    return %c0_i32, %c0_i32_0 : i32, i32
  }
  func.func @transform_3(%arg0: i32, %arg1: i32) -> (i32, i32, i32) {
    %c0_i32 = arith.constant 0 : i32
    %c0_i32_0 = arith.constant 0 : i32
    return %arg1, %arg0, %c0_i32 : i32, i32, i32
  }
  func.func @transform_4(%arg0: i32, %arg1: i32) -> (i32, i32) {
    %c0_i32 = arith.constant 0 : i32
    %c0_i32_0 = arith.constant 0 : i32
    return %arg0, %c0_i32 : i32, i32
  }
}

</mosaic_0001>

<llo_original>
// kernel: forward.1
$region0: #{forward.1}
  #allocation0 [shape = 'u32[]', space=smem, size = 0x4, offset = 0x4, fixed_abs, tag = 'smem constant byte address 0x4 - core index']
  #allocation1 [shape = 'u32[144,128]{1,0:T(1,128)}', space=vmem, size = 0x12000, scoped, tag = 'internal scratch']
  %s0 = inlined_call_operand.hbm [shape: f32[8,8,16], index: 0, kind: input, shape index: {}]
  %s1 = inlined_call_operand.vmem [shape: f32[8,128], index: 1, kind: input, shape index: {}, may-alias: {1,4}]
  %s2 = inlined_call_operand.hbm [shape: f32[424,512], index: 2, kind: input, shape index: {}]
  %s3 = inlined_call_operand.hbm [shape: f32[8,8,128], index: 3, kind: output, shape index: {0}]
  %s4 = inlined_call_operand.vmem [shape: f32[8,128], index: 4, kind: output, shape index: {1}, may-alias: {1,4}]
  %5 = xla_tuple %s3, %s4
  %s6 = sld [smem:[#allocation0]]
  $region65: #{forward.1} parent=0
    _
  %s8 = ssub.s32 1, %s6
  %s9 = scalar_select 0, %s8, %s6
  $region1: #{forward.1} parent=0
    #allocation2 [shape = 'u8[8192]{0}', space=vmem, size = 0x2000, scoped, tag = 'input window, operand 0']
    #allocation3 [shape = 's32[2]{0}', space=sflag, size = 0x8, scoped, tag = 'scoped memory for forward.1']
    #allocation4 [shape = 's32[2]{0}', space=sflag, size = 0x8, scoped, tag = 'scoped memory for forward.1']
    #allocation5 [shape = 'u8[868352]{0}', space=vmem, size = 0xd4000, scoped, tag = 'input window, operand 2, single buffered']
    #allocation6 [shape = 's32[1]{0}', space=sflag, size = 0x4, scoped, tag = 'scoped memory for forward.1']
    #allocation7 [shape = 'u8[8192]{0}', space=vmem, size = 0x2000, scoped, tag = 'output window, operand 0']
    %10 = vsyncpa [#allocation3], 0
    %s11 = scalar_lea.sflag [#allocation3], 1
    %12 = vsyncpa %s11, 0
    %13 = vsyncpa [#allocation6], 0
    %14 = vsyncpa [#allocation4], 0
    %s15 = scalar_lea.sflag [#allocation4], 1
    %16 = vsyncpa %s15, 0
    loop: start=0, step=1, limit=10
    $region2: #{forward.1} parent=1 // loop_pre_header
      _
    $region3: #{forward.1} parent=1 // loop_header
      %s18 = sphi 0, %s22
      %p19 = scmp.ge.s32.totalorder %s18, 10
      %s25 = sphi 0, %s37
      %s26 = sphi 0, %s33
      %s27 = sphi 0, %s25
      %s28 = sphi 0, %s26
      %s29 = sphi 0, %s27
      %s30 = sphi 0, %s28
      %s42 = sphi 0, %s44
      %s45 = sphi 0, %s42
      %s46 = sphi 0, %s45
      %s62 = sphi 0, %s46
      %s68 = sphi 0, %s70
      %s71 = sphi 0, %s68
      %s72 = sphi 0, %s71
      %s88 = sphi 0, %s72
      %s92 = sphi 0, %s92
      %s94 = sphi 0, %s92
      %s95 = sphi 0, %s94
      %s109 = sphi 0, %s95
      %s117 = sphi 0, %s119
      %s120 = sphi 0, %s117
      %s121 = sphi 0, %s120
      %s137 = sphi 0, %s121
      %s143 = sphi 0, %s145
      %s146 = sphi 0, %s143
      %s147 = sphi 0, %s146
      %s163 = sphi 0, %s147
    $region4: #{forward.1} parent=1 // loop_header_branch
      %21 = sbr.rel (%p19) target = $region8
    $region5: #{forward.1} parent=1 // loop_body
      %s23 = ssub.s32 %s18, 1
      %s24 = ssub.s32 %s18, 2
      %s31 = sadd.s32 1, %s26
      %p32 = scmp.ge.s32.totalorder %s31, 8
      %s33 = scalar_select %p32, 0, %s31
      %s34 = sadd.s32 1, %s25
      %s35 = scalar_select %p32, %s34, %s25
      %p36 = scmp.ge.s32.totalorder %s35, 1
      %s37 = scalar_select %p36, 0, %s35
      %s38 = ssub.s32 %s26, %s33
      %s39 = ssub.s32 %s25, %s37
      %s40 = sor.u32 %s38, %s39
      %p41 = scmp.eq.s32.totalorder %s40, 0
      %s43 = sadd.s32 %s42, 1
      %s44 = scalar_select %p41, %s42, %s43
      %p47 = pneg %p41
      %p48 = scmp.eq.s32.totalorder %s18, 7
      %p49 = por %p47, %p48
      %p50 = scmp.ne.s32.totalorder %s42, %s45
      %p51 = scmp.eq.s32.totalorder %s18, 0
      %p52 = por %p50, %p51
      %p53 = scmp.ne.s32.totalorder %s42, %s45
      %p54 = scmp.eq.s32.totalorder %s23, 7
      %p55 = por %p53, %p54
      %p56 = scmp.ne.s32.totalorder %s45, %s46
      %p57 = scmp.eq.s32.totalorder %s23, 0
      %p58 = por %p56, %p57
      %p59 = scmp.ne.s32.totalorder %s45, %s46
      %p60 = scmp.eq.s32.totalorder %s24, 7
      %p61 = por %p59, %p60
      %p63 = scmp.ne.s32.totalorder %s46, %s62
      %p64 = scmp.eq.s32.totalorder %s24, 0
      %p65 = por %p63, %p64
      %s66 = ssub.s32 %s25, %s37
      %p67 = scmp.eq.s32.totalorder %s66, 0
      %s69 = sadd.s32 %s68, 1
      %s70 = scalar_select %p67, %s68, %s69
      %p73 = pneg %p67
      %p74 = scmp.eq.s32.totalorder %s18, 7
      %p75 = por %p73, %p74
      %p76 = scmp.ne.s32.totalorder %s68, %s71
      %p77 = scmp.eq.s32.totalorder %s18, 0
      %p78 = por %p76, %p77
      %p79 = scmp.ne.s32.totalorder %s68, %s71
      %p80 = scmp.eq.s32.totalorder %s23, 7
      %p81 = por %p79, %p80
      %p82 = scmp.ne.s32.totalorder %s71, %s72
      %p83 = scmp.eq.s32.totalorder %s23, 0
      %p84 = por %p82, %p83
      %p85 = scmp.ne.s32.totalorder %s71, %s72
      %p86 = scmp.eq.s32.totalorder %s24, 7
      %p87 = por %p85, %p86
      %p89 = scmp.ne.s32.totalorder %s72, %s88
      %p90 = scmp.eq.s32.totalorder %s24, 0
      %p91 = por %p89, %p90
      %s93 = sadd.s32 %s92, 1
      %p96 = scmp.eq.s32.totalorder %s18, 7
      %p97 = scmp.ne.s32.totalorder %s92, %s94
      %p98 = scmp.eq.s32.totalorder %s18, 0
      %p99 = por %p97, %p98
      %p100 = scmp.ne.s32.totalorder %s92, %s94
      %p101 = scmp.eq.s32.totalorder %s23, 7
      %p102 = por %p100, %p101
      %p103 = scmp.ne.s32.totalorder %s94, %s95
      %p104 = scmp.eq.s32.totalorder %s23, 0
      %p105 = por %p103, %p104
      %p106 = scmp.ne.s32.totalorder %s94, %s95
      %p107 = scmp.eq.s32.totalorder %s24, 7
      %p108 = por %p106, %p107
      %p110 = scmp.ne.s32.totalorder %s95, %s109
      %p111 = scmp.eq.s32.totalorder %s24, 0
      %p112 = por %p110, %p111
      %s113 = ssub.s32 %s26, %s33
      %s114 = ssub.s32 %s25, %s37
      %s115 = sor.u32 %s113, %s114
      %p116 = scmp.eq.s32.totalorder %s115, 0
      %s118 = sadd.s32 %s117, 1
      %s119 = scalar_select %p116, %s117, %s118
      %p122 = pneg %p116
      %p123 = scmp.eq.s32.totalorder %s18, 7
      %p124 = por %p122, %p123
      %p125 = scmp.ne.s32.totalorder %s117, %s120
      %p126 = scmp.eq.s32.totalorder %s18, 0
      %p127 = por %p125, %p126
      %p128 = scmp.ne.s32.totalorder %s117, %s120
      %p129 = scmp.eq.s32.totalorder %s23, 7
      %p130 = por %p128, %p129
      %p131 = scmp.ne.s32.totalorder %s120, %s121
      %p132 = scmp.eq.s32.totalorder %s23, 0
      %p133 = por %p131, %p132
      %p134 = scmp.ne.s32.totalorder %s120, %s121
      %p135 = scmp.eq.s32.totalorder %s24, 7
      %p136 = por %p134, %p135
      %p138 = scmp.ne.s32.totalorder %s121, %s137
      %p139 = scmp.eq.s32.totalorder %s24, 0
      %p140 = por %p138, %p139
      %s141 = ssub.s32 %s25, %s37
      %p142 = scmp.eq.s32.totalorder %s141, 0
      %s144 = sadd.s32 %s143, 1
      %s145 = scalar_select %p142, %s143, %s144
      %p148 = pneg %p142
      %p149 = scmp.eq.s32.totalorder %s18, 7
      %p150 = por %p148, %p149
      %p151 = scmp.ne.s32.totalorder %s143, %s146
      %p152 = scmp.eq.s32.totalorder %s18, 0
      %p153 = por %p151, %p152
      %p154 = scmp.ne.s32.totalorder %s143, %s146
      %p155 = scmp.eq.s32.totalorder %s23, 7
      %p156 = por %p154, %p155
      %p157 = scmp.ne.s32.totalorder %s146, %s147
      %p158 = scmp.eq.s32.totalorder %s23, 0
      %p159 = por %p157, %p158
      %p160 = scmp.ne.s32.totalorder %s146, %s147
      %p161 = scmp.eq.s32.totalorder %s24, 7
      %p162 = por %p160, %p161
      %p164 = scmp.ne.s32.totalorder %s147, %s163
      %p165 = scmp.eq.s32.totalorder %s24, 0
      %p166 = por %p164, %p165
      %p167 = scmp.le.s32.totalorder 1, %s18
      %p168 = scmp.lt.s32.totalorder %s18, 9
      %p169 = pnand %p167, %p168
      %p170 = pneg %p169
      // Predicated region
      $region9: #{forward.1} parent=5 // pred_check
        _
      $region10: #{forward.1} parent=5 // pred_check_branch
        %172 = sbr.rel (%p169) target = $region12
      $region11: #{forward.1} parent=5 // pred_region
        %s173 = ssub.s32 %s18, 1
        // Predicated region
        $region13: #{forward.1} parent=11 // pred_check
          %p174 = pneg %p84
        $region14: #{forward.1} parent=11 // pred_check_branch
          %176 = sbr.rel (%p174) target = $region16
        $region15: #{forward.1} parent=11 // pred_region
          %p177 = scmp.lt.s32.totalorder %s27, 0
          %s178 = scalar_select %p177, %s27, 0
          %s179 = smul.addr %s178, 8
          %s180 = scalar_lea.vmem %s1, %s179
        $region16: #{forward.1} parent=11 // pred_fallthru
          _
        // Predicated region
        $region17: #{forward.1} parent=11 // pred_check
          %p181 = pneg %p105
        $region18: #{forward.1} parent=11 // pred_check_branch
          %183 = sbr.rel (%p181) target = $region20
        $region19: #{forward.1} parent=11 // pred_region
          %s185 = ssub.s32 27136, 27136
          %186 = vsyncadd [#allocation6], %s185
          %s187 = sshll.u32 [#allocation5], 4
          %s188 = int_to_ptr.vmem [resolvable:$true] %s187
          %193 = dma.hbm_to_vmem [thread:$0]  %s2, 27136, %s188, [#allocation6], 512, 512, 32
        $region20: #{forward.1} parent=11 // pred_fallthru
          _
      $region12: #{forward.1} parent=5 // pred_fallthru
        _
      %p194 = scmp.lt.s32.totalorder %s18, 8
      // Predicated region
      $region21: #{forward.1} parent=5 // pred_check
        %p195 = pneg %p194
      $region22: #{forward.1} parent=5 // pred_check_branch
        %197 = sbr.rel (%p195) target = $region24
      $region23: #{forward.1} parent=5 // pred_region
        // Predicated region
        $region25: #{forward.1} parent=23 // pred_check
          %p198 = pneg %p52
        $region26: #{forward.1} parent=23 // pred_check_branch
          %200 = sbr.rel (%p198) target = $region28
        $region27: #{forward.1} parent=23 // pred_region
          %s201 = sand.u32 %s42, 1
          %s202 = scalar_lea.sflag [#allocation3], %s201
          %s203 = sand.u32 %s42, 1
          %s204 = smul.addr %s203, 8
          %s205 = scalar_lea.vmem [#allocation2], %s204
          %s207 = ssub.s32 128, 128
          %208 = vsyncadd %s202, %s207
          %s209 = sadd.s32 %s25, %s26
          %s210 = smul.addr %s209, 128
          %s211 = scalar_lea.hbm %s0, %s210
          %s213 = sshll.u32 %s205, 4
          %s214 = int_to_ptr.vmem [resolvable:$true] %s213
          %216 = dma.hbm_to_vmem [thread:$0]  %s211, 128, %s214, %s202
        $region28: #{forward.1} parent=23 // pred_fallthru
          _
      $region24: #{forward.1} parent=5 // pred_fallthru
        _
      %p217 = scmp.le.s32.totalorder 1, %s18
      %p218 = scmp.lt.s32.totalorder %s18, 9
      %p219 = pnand %p217, %p218
      %p220 = pneg %p219
      // Predicated region
      $region29: #{forward.1} parent=5 // pred_check
        _
      $region30: #{forward.1} parent=5 // pred_check_branch
        %222 = sbr.rel (%p219) target = $region32
      $region31: #{forward.1} parent=5 // pred_region
        %s223 = ssub.s32 %s18, 1
        %s224 = sand.u32 %s45, 1
        %s225 = scalar_lea.sflag [#allocation3], %s224
        %s226 = sand.u32 %s45, 1
        %s227 = smul.addr %s226, 8
        %s228 = scalar_lea.vmem [#allocation2], %s227
        // Predicated region
        $region33: #{forward.1} parent=31 // pred_check
          %p229 = pneg %p58
        $region34: #{forward.1} parent=31 // pred_check_branch
          %231 = sbr.rel (%p229) target = $region36
        $region35: #{forward.1} parent=31 // pred_region
          %232 = dma.done %s225, 128
        $region36: #{forward.1} parent=31 // pred_fallthru
          _
        // Predicated region
        $region37: #{forward.1} parent=31 // pred_check
          %p233 = pneg %p105
        $region38: #{forward.1} parent=31 // pred_check_branch
          %235 = sbr.rel (%p233) target = $region40
        $region39: #{forward.1} parent=31 // pred_region
          %236 = dma.done [#allocation6], 27136
        $region40: #{forward.1} parent=31 // pred_fallthru
          _
        %s237 = sand.u32 %s45, 1
        %s238 = scalar_lea.sflag [#allocation3], %s237
        %s239 = sand.u32 %s45, 1
        %s240 = smul.addr %s239, 8
        %s241 = scalar_lea.vmem [#allocation2], %s240
        %p242 = pneg %p58
        %p243 = pneg %p55
        %p244 = scmp.lt.s32.totalorder %s27, 0
        %s245 = scalar_select %p244, %s27, 0
        %s246 = smul.addr %s245, 8
        %s247 = scalar_lea.vmem %s1, %s246
        %p248 = pneg %p84
        %p249 = pneg %p81
        %p250 = pneg %p105
        %p251 = pneg %p102
        %p252 = pneg %p133
        %p253 = pneg %p130
        %s254 = sand.u32 %s120, 1
        %s255 = scalar_lea.sflag [#allocation4], %s254
        %s256 = sand.u32 %s120, 1
        %s257 = smul.addr %s256, 8
        %s258 = scalar_lea.vmem [#allocation7], %s257
        %p259 = pneg %p159
        %p260 = pneg %p156
        %p261 = scmp.lt.s32.totalorder %s27, 0
        %s262 = scalar_select %p261, %s27, 0
        %s263 = smul.addr %s262, 8
        %s264 = scalar_lea.vmem %s4, %s263
        %p265 = scmp.lt.s32.totalorder %s27, 0
        %s266 = scalar_select %p265, %s27, 0
        %s267 = smul.addr %s266, 8
        %s268 = scalar_lea.vmem %s1, %s267
        %p269 = scmp.lt.s32.totalorder %s27, 0
        %s270 = scalar_select %p269, %s27, 0
        %s271 = smul.addr %s270, 8
        %s272 = scalar_lea.vmem %s4, %s271
        %p273 = scmp.eq.s32.totalorder %s28, 0
        // Predicated region
        $region41: #{forward.1} parent=31 // pred_check
          %p274 = pneg %p273
        $region42: #{forward.1} parent=31 // pred_check_branch
          %276 = sbr.rel (%p274) target = $region44
        $region43: #{forward.1} parent=31 // pred_region
          %v277 = vld [vmem:[%s268] sm:$0xff]
          %278 = vst [vmem:[%s272] sm:$0xff] %v277
        $region44: #{forward.1} parent=31 // pred_fallthru
          _
        %v279 = vld [vmem:[%s272] sm:$0xff]
        %v280 = vld [vmem:[%s228] sm:$0xff]
        %v281 = vld [vmem:[#allocation5] sm:$0xff]
        %v282 = vld [vmem:[#allocation5 + $0x20] sm:$0xff]
        %v283 = vld [vmem:[#allocation5 + $0x40] ss:$0 sm:$0xff]
        %vm284 = vcmask 130048
        %v286 = vsel %vm284, %v280, 0
        %288 = vmatprep.subr.mxu0 0.0
        %289 = vmatpush1.msra.mxu0 %v281
        %290 = vmatprep.subr.mxu0 0.0
        %291 = vmatpush1.msra.mxu0 %v282
        %292 = vmatprep.subr.mxu0 0.0
        %293 = vmatpush1.msra.mxu0 0.0
        %294 = vmatprep.subr.mxu0 0.0
        %295 = vmatpush1.msra.mxu0 0.0
        %296 = vmatprep.subr.mxu0 0.0
        %297 = vmatpush1.msra.mxu0 0.0
        %298 = vmatprep.subr.mxu0 0.0
        %299 = vmatpush1.msra.mxu0 0.0
        %300 = vmatprep.subr.mxu0 0.0
        %301 = vmatpush1.msra.mxu0 0.0
        %302 = vmatprep.subr.mxu0 0.0
        %303 = vmatpush1.msra.mxu0 0.0
        %304 = vmatprep.subr.mxu0 0.0
        %305 = vmatpush1.msra.mxu0 0.0
        %306 = vmatprep.subr.mxu0 0.0
        %307 = vmatpush1.msra.mxu0 0.0
        %308 = vmatprep.subr.mxu0 0.0
        %309 = vmatpush1.msra.mxu0 0.0
        %310 = vmatprep.subr.mxu0 0.0
        %311 = vmatpush1.msra.mxu0 0.0
        %312 = vmatprep.subr.mxu0 0.0
        %313 = vmatpush1.msra.mxu0 0.0
        %314 = vmatprep.subr.mxu0 0.0
        %315 = vmatpush1.msra.mxu0 0.0
        %316 = vmatprep.subr.mxu0 0.0
        %317 = vmatpush1.msra.mxu0 0.0
        %318 = vmatprep.subr.mxu0 0.0
        %319 = vmatpush1.msra.mxu0 0.0
        %320 = vmatprep.subr.mxu0 0.0
        %321 = vmatpush1.msra.mxu0 0.0
        %322 = vmatprep.subr.mxu0 0.0
        %323 = vmatpush1.msra.mxu0 0.0
        %324 = vmatprep.subr.mxu0 0.0
        %325 = vmatpush1.msra.mxu0 0.0
        %326 = vmatprep.subr.mxu0 0.0
        %327 = vmatpush1.msra.mxu0 0.0
        %328 = vmatprep.subr.mxu0 0.0
        %329 = vmatpush1.msra.mxu0 0.0
        %330 = vmatprep.subr.mxu0 0.0
        %331 = vmatpush1.msra.mxu0 0.0
        %332 = vmatprep.subr.mxu0 0.0
        %333 = vmatpush1.msra.mxu0 0.0
        %334 = vmatprep.subr.mxu0 0.0
        %335 = vmatpush1.msra.mxu0 0.0
        %336 = vmatprep.subr.mxu0 0.0
        %337 = vmatpush1.msra.mxu0 0.0
        %338 = vmatprep.subr.mxu0 0.0
        %339 = vmatpush1.msra.mxu0 0.0
        %340 = vmatprep.subr.mxu0 0.0
        %341 = vmatpush1.msra.mxu0 0.0
        %342 = vmatprep.subr.mxu0 0.0
        %343 = vmatpush1.msra.mxu0 0.0
        %344 = vmatprep.subr.mxu0 0.0
        %345 = vmatpush1.msra.mxu0 0.0
        %346 = vmatprep.subr.mxu0 0.0
        %347 = vmatpush1.msra.mxu0 0.0
        %348 = vmatprep.subr.mxu0 0.0
        %349 = vmatpush1.msra.mxu0 0.0
        %350 = vmatprep.subr.mxu0 0.0
        %351 = vmatpush1.msra.mxu0 0.0
        %352 = vmatprep.mubr.f32.mxu0 0.0
        %353 = vmatmul.mubr.f32.gmra.mrb[0].mxu0 %v286
        %v354 = vpop.f32.mrb[0].mxu0
        %v355 = vadd.f32 %v283, %v354
        %v356 = vpop.f32.mrb[0].mxu0
        %357 = vdwg.mxu0
        %v358 = vmax.f32 %v355, 0.0
        %v359 = vld [vmem:[#allocation5 + $0x60] sm:$0xff]
        %v360 = vld [vmem:[#allocation5 + $0x68] sm:$0xff]
        %v361 = vld [vmem:[#allocation5 + $0x70] sm:$0xff]
        %v362 = vld [vmem:[#allocation5 + $0x78] sm:$0xff]
        %v363 = vld [vmem:[#allocation5 + $0x80] sm:$0xff]
        %v364 = vld [vmem:[#allocation5 + $0x88] sm:$0xff]
        %v365 = vld [vmem:[#allocation5 + $0x90] sm:$0xff]
        %v366 = vld [vmem:[#allocation5 + $0x98] sm:$0xff]
        %v367 = vld [vmem:[#allocation5 + $0xa0] sm:$0xff]
        %v368 = vld [vmem:[#allocation5 + $0xa8] sm:$0xff]
        %v369 = vld [vmem:[#allocation5 + $0xb0] sm:$0xff]
        %v370 = vld [vmem:[#allocation5 + $0xb8] sm:$0xff]
        %v371 = vld [vmem:[#allocation5 + $0xc0] sm:$0xff]
        %v372 = vld [vmem:[#allocation5 + $0xc8] sm:$0xff]
        %v373 = vld [vmem:[#allocation5 + $0xd0] sm:$0xff]
        %v374 = vld [vmem:[#allocation5 + $0xd8] sm:$0xff]
        %v375 = vld [vmem:[#allocation5 + $0xe0] sm:$0xff]
        %v376 = vld [vmem:[#allocation5 + $0xe8] sm:$0xff]
        %v377 = vld [vmem:[#allocation5 + $0xf0] sm:$0xff]
        %v378 = vld [vmem:[#allocation5 + $0xf8] sm:$0xff]
        %v379 = vld [vmem:[#allocation5 + $0x100] sm:$0xff]
        %v380 = vld [vmem:[#allocation5 + $0x108] sm:$0xff]
        %v381 = vld [vmem:[#allocation5 + $0x110] sm:$0xff]
        %v382 = vld [vmem:[#allocation5 + $0x118] sm:$0xff]
        %v383 = vld [vmem:[#allocation5 + $0x120] sm:$0xff]
        %v384 = vld [vmem:[#allocation5 + $0x128] sm:$0xff]
        %v385 = vld [vmem:[#allocation5 + $0x130] sm:$0xff]
        %v386 = vld [vmem:[#allocation5 + $0x138] sm:$0xff]
        %v387 = vld [vmem:[#allocation5 + $0x140] sm:$0xff]
        %v388 = vld [vmem:[#allocation5 + $0x148] sm:$0xff]
        %v389 = vld [vmem:[#allocation5 + $0x150] sm:$0xff]
        %v390 = vld [vmem:[#allocation5 + $0x158] sm:$0xff]
        %v391 = vld [vmem:[#allocation5 + $0x160] sm:$0xff]
        %v392 = vld [vmem:[#allocation5 + $0x168] sm:$0xff]
        %v393 = vld [vmem:[#allocation5 + $0x170] sm:$0xff]
        %v394 = vld [vmem:[#allocation5 + $0x178] sm:$0xff]
        %v395 = vld [vmem:[#allocation5 + $0x180] sm:$0xff]
        %v396 = vld [vmem:[#allocation5 + $0x188] sm:$0xff]
        %v397 = vld [vmem:[#allocation5 + $0x190] sm:$0xff]
        %v398 = vld [vmem:[#allocation5 + $0x198] sm:$0xff]
        %v399 = vld [vmem:[#allocation5 + $0x1a0] sm:$0xff]
        %v400 = vld [vmem:[#allocation5 + $0x1a8] sm:$0xff]
        %v401 = vld [vmem:[#allocation5 + $0x1b0] sm:$0xff]
        %v402 = vld [vmem:[#allocation5 + $0x1b8] sm:$0xff]
        %v403 = vld [vmem:[#allocation5 + $0x1c0] sm:$0xff]
        %v404 = vld [vmem:[#allocation5 + $0x1c8] sm:$0xff]
        %v405 = vld [vmem:[#allocation5 + $0x1d0] sm:$0xff]
        %v406 = vld [vmem:[#allocation5 + $0x1d8] sm:$0xff]
        %v407 = vld [vmem:[#allocation5 + $0x1e0] sm:$0xff]
        %v408 = vld [vmem:[#allocation5 + $0x1e8] sm:$0xff]
        %v409 = vld [vmem:[#allocation5 + $0x1f0] sm:$0xff]
        %v410 = vld [vmem:[#allocation5 + $0x1f8] sm:$0xff]
        %v411 = vld [vmem:[#allocation5 + $0x200] sm:$0xff]
        %v412 = vld [vmem:[#allocation5 + $0x208] sm:$0xff]
        %v413 = vld [vmem:[#allocation5 + $0x210] sm:$0xff]
        %v414 = vld [vmem:[#allocation5 + $0x218] sm:$0xff]
        %v415 = vld [vmem:[#allocation5 + $0x220] sm:$0xff]
        %v416 = vld [vmem:[#allocation5 + $0x228] sm:$0xff]
        %v417 = vld [vmem:[#allocation5 + $0x230] sm:$0xff]
        %v418 = vld [vmem:[#allocation5 + $0x238] sm:$0xff]
        %v419 = vld [vmem:[#allocation5 + $0x240] sm:$0xff]
        %v420 = vld [vmem:[#allocation5 + $0x248] sm:$0xff]
        %v421 = vld [vmem:[#allocation5 + $0x250] sm:$0xff]
        %v422 = vld [vmem:[#allocation5 + $0x258] sm:$0xff]
        %v423 = vld [vmem:[#allocation5 + $0x260] sm:$0xff]
        %v424 = vld [vmem:[#allocation5 + $0x268] sm:$0xff]
        %v425 = vld [vmem:[#allocation5 + $0x270] sm:$0xff]
        %v426 = vld [vmem:[#allocation5 + $0x278] sm:$0xff]
        %v427 = vld [vmem:[#allocation5 + $0x280] sm:$0xff]
        %v428 = vld [vmem:[#allocation5 + $0x288] sm:$0xff]
        %v429 = vld [vmem:[#allocation5 + $0x290] sm:$0xff]
        %v430 = vld [vmem:[#allocation5 + $0x298] sm:$0xff]
        %v431 = vld [vmem:[#allocation5 + $0x2a0] sm:$0xff]
        %v432 = vld [vmem:[#allocation5 + $0x2a8] sm:$0xff]
        %v433 = vld [vmem:[#allocation5 + $0x2b0] sm:$0xff]
        %v434 = vld [vmem:[#allocation5 + $0x2b8] sm:$0xff]
        %v435 = vld [vmem:[#allocation5 + $0x2c0] sm:$0xff]
        %v436 = vld [vmem:[#allocation5 + $0x2c8] sm:$0xff]
        %v437 = vld [vmem:[#allocation5 + $0x2d0] sm:$0xff]
        %v438 = vld [vmem:[#allocation5 + $0x2d8] sm:$0xff]
        %v439 = vld [vmem:[#allocation5 + $0x2e0] sm:$0xff]
        %v440 = vld [vmem:[#allocation5 + $0x2e8] sm:$0xff]
        %v441 = vld [vmem:[#allocation5 + $0x2f0] sm:$0xff]
        %v442 = vld [vmem:[#allocation5 + $0x2f8] sm:$0xff]
        %v443 = vld [vmem:[#allocation5 + $0x300] sm:$0xff]
        %v444 = vld [vmem:[#allocation5 + $0x308] sm:$0xff]
        %v445 = vld [vmem:[#allocation5 + $0x310] sm:$0xff]
        %v446 = vld [vmem:[#allocation5 + $0x318] sm:$0xff]
        %v447 = vld [vmem:[#allocation5 + $0x320] sm:$0xff]
        %v448 = vld [vmem:[#allocation5 + $0x328] sm:$0xff]
        %v449 = vld [vmem:[#allocation5 + $0x330] sm:$0xff]
        %v450 = vld [vmem:[#allocation5 + $0x338] sm:$0xff]
        %v451 = vld [vmem:[#allocation5 + $0x340] sm:$0xff]
        %v452 = vld [vmem:[#allocation5 + $0x348] sm:$0xff]
        %v453 = vld [vmem:[#allocation5 + $0x350] sm:$0xff]
        %v454 = vld [vmem:[#allocation5 + $0x358] sm:$0xff]
        %v455 = vld [vmem:[#allocation5 + $0x360] sm:$0xff]
        %v456 = vld [vmem:[#allocation5 + $0x368] sm:$0xff]
        %v457 = vld [vmem:[#allocation5 + $0x370] sm:$0xff]
        %v458 = vld [vmem:[#allocation5 + $0x378] sm:$0xff]
        %v459 = vld [vmem:[#allocation5 + $0x380] sm:$0xff]
        %v460 = vld [vmem:[#allocation5 + $0x388] sm:$0xff]
        %v461 = vld [vmem:[#allocation5 + $0x390] sm:$0xff]
        %v462 = vld [vmem:[#allocation5 + $0x398] sm:$0xff]
        %v463 = vld [vmem:[#allocation5 + $0x3a0] sm:$0xff]
        %v464 = vld [vmem:[#allocation5 + $0x3a8] sm:$0xff]
        %v465 = vld [vmem:[#allocation5 + $0x3b0] sm:$0xff]
        %v466 = vld [vmem:[#allocation5 + $0x3b8] sm:$0xff]
        %v467 = vld [vmem:[#allocation5 + $0x3c0] sm:$0xff]
        %v468 = vld [vmem:[#allocation5 + $0x3c8] sm:$0xff]
        %v469 = vld [vmem:[#allocation5 + $0x3d0] sm:$0xff]
        %v470 = vld [vmem:[#allocation5 + $0x3d8] sm:$0xff]
        %v471 = vld [vmem:[#allocation5 + $0x3e0] sm:$0xff]
        %v472 = vld [vmem:[#allocation5 + $0x3e8] sm:$0xff]
        %v473 = vld [vmem:[#allocation5 + $0x3f0] sm:$0xff]
        %v474 = vld [vmem:[#allocation5 + $0x3f8] sm:$0xff]
        %v475 = vld [vmem:[#allocation5 + $0x400] sm:$0xff]
        %v476 = vld [vmem:[#allocation5 + $0x408] sm:$0xff]
        %v477 = vld [vmem:[#allocation5 + $0x410] sm:$0xff]
        %v478 = vld [vmem:[#allocation5 + $0x418] sm:$0xff]
        %v479 = vld [vmem:[#allocation5 + $0x420] sm:$0xff]
        %v480 = vld [vmem:[#allocation5 + $0x428] sm:$0xff]
        %v481 = vld [vmem:[#allocation5 + $0x430] sm:$0xff]
        %v482 = vld [vmem:[#allocation5 + $0x438] sm:$0xff]
        %v483 = vld [vmem:[#allocation5 + $0x440] sm:$0xff]
        %v484 = vld [vmem:[#allocation5 + $0x448] sm:$0xff]
        %v485 = vld [vmem:[#allocation5 + $0x450] sm:$0xff]
        %v486 = vld [vmem:[#allocation5 + $0x458] sm:$0xff]
        %s487 = scalar_lea.vmem [#allocation5], 1120
        %v488 = vld [vmem:[%s487] ss:$8 sm:$0xf]
        %489 = vmatprep.subr.mxu0 %v424
        %490 = vmatpush1.msra.mxu0 %v423
        %491 = vmatprep.subr.mxu0 %v428
        %492 = vmatpush1.msra.mxu0 %v427
        %493 = vmatprep.subr.mxu0 %v432
        %494 = vmatpush1.msra.mxu0 %v431
        %495 = vmatprep.subr.mxu0 %v436
        %496 = vmatpush1.msra.mxu0 %v435
        %497 = vmatprep.subr.mxu0 %v440
        %498 = vmatpush1.msra.mxu0 %v439
        %499 = vmatprep.subr.mxu0 %v444
        %500 = vmatpush1.msra.mxu0 %v443
        %501 = vmatprep.subr.mxu0 %v448
        %502 = vmatpush1.msra.mxu0 %v447
        %503 = vmatprep.subr.mxu0 %v452
        %504 = vmatpush1.msra.mxu0 %v451
        %505 = vmatprep.subr.mxu0 %v456
        %506 = vmatpush1.msra.mxu0 %v455
        %507 = vmatprep.subr.mxu0 %v460
        %508 = vmatpush1.msra.mxu0 %v459
        %509 = vmatprep.subr.mxu0 %v464
        %510 = vmatpush1.msra.mxu0 %v463
        %511 = vmatprep.subr.mxu0 %v468
        %512 = vmatpush1.msra.mxu0 %v467
        %513 = vmatprep.subr.mxu0 %v472
        %514 = vmatpush1.msra.mxu0 %v471
        %515 = vmatprep.subr.mxu0 %v476
        %516 = vmatpush1.msra.mxu0 %v475
        %517 = vmatprep.subr.mxu0 %v480
        %518 = vmatpush1.msra.mxu0 %v479
        %519 = vmatprep.subr.mxu0 %v484
        %520 = vmatpush1.msra.mxu0 %v483
        %521 = vmatprep.subr.mxu0 0.0
        %522 = vmatpush1.msra.mxu0 0.0
        %523 = vmatprep.subr.mxu0 0.0
        %524 = vmatpush1.msra.mxu0 0.0
        %525 = vmatprep.subr.mxu0 0.0
        %526 = vmatpush1.msra.mxu0 0.0
        %527 = vmatprep.subr.mxu0 0.0
        %528 = vmatpush1.msra.mxu0 0.0
        %529 = vmatprep.subr.mxu0 0.0
        %530 = vmatpush1.msra.mxu0 0.0
        %531 = vmatprep.subr.mxu0 0.0
        %532 = vmatpush1.msra.mxu0 0.0
        %533 = vmatprep.subr.mxu0 0.0
        %534 = vmatpush1.msra.mxu0 0.0
        %535 = vmatprep.subr.mxu0 0.0
        %536 = vmatpush1.msra.mxu0 0.0
        %537 = vmatprep.subr.mxu0 0.0
        %538 = vmatpush1.msra.mxu0 0.0
        %539 = vmatprep.subr.mxu0 0.0
        %540 = vmatpush1.msra.mxu0 0.0
        %541 = vmatprep.subr.mxu0 0.0
        %542 = vmatpush1.msra.mxu0 0.0
        %543 = vmatprep.subr.mxu0 0.0
        %544 = vmatpush1.msra.mxu0 0.0
        %545 = vmatprep.subr.mxu0 0.0
        %546 = vmatpush1.msra.mxu0 0.0
        %547 = vmatprep.subr.mxu0 0.0
        %548 = vmatpush1.msra.mxu0 0.0
        %549 = vmatprep.subr.mxu0 0.0
        %550 = vmatpush1.msra.mxu0 0.0
        %551 = vmatprep.subr.mxu0 0.0
        %552 = vmatpush1.msra.mxu0 0.0
        %553 = vmatprep.mubr.f32.mxu0 0.0
        %554 = vmatmul.mubr.f32.gmra.mrb[0].mxu0 %v279
        %v555 = vpop.f32.mrb[0].mxu0
        %v556 = vadd.f32 0.0, %v555
        %v557 = vpop.f32.mrb[0].mxu0
        %v558 = vadd.f32 0.0, %v557
        %559 = vdwg.mxu0
        %560 = vmatprep.subr.mxu0 %v426
        %561 = vmatpush1.msra.mxu0 %v425
        %562 = vmatprep.subr.mxu0 %v430
        %563 = vmatpush1.msra.mxu0 %v429
        %564 = vmatprep.subr.mxu0 %v434
        %565 = vmatpush1.msra.mxu0 %v433
        %566 = vmatprep.subr.mxu0 %v438
        %567 = vmatpush1.msra.mxu0 %v437
        %568 = vmatprep.subr.mxu0 %v442
        %569 = vmatpush1.msra.mxu0 %v441
        %570 = vmatprep.subr.mxu0 %v446
        %571 = vmatpush1.msra.mxu0 %v445
        %572 = vmatprep.subr.mxu0 %v450
        %573 = vmatpush1.msra.mxu0 %v449
        %574 = vmatprep.subr.mxu0 %v454
        %575 = vmatpush1.msra.mxu0 %v453
        %576 = vmatprep.subr.mxu0 %v458
        %577 = vmatpush1.msra.mxu0 %v457
        %578 = vmatprep.subr.mxu0 %v462
        %579 = vmatpush1.msra.mxu0 %v461
        %580 = vmatprep.subr.mxu0 %v466
        %581 = vmatpush1.msra.mxu0 %v465
        %582 = vmatprep.subr.mxu0 %v470
        %583 = vmatpush1.msra.mxu0 %v469
        %584 = vmatprep.subr.mxu0 %v474
        %585 = vmatpush1.msra.mxu0 %v473
        %586 = vmatprep.subr.mxu0 %v478
        %587 = vmatpush1.msra.mxu0 %v477
        %588 = vmatprep.subr.mxu0 %v482
        %589 = vmatpush1.msra.mxu0 %v481
        %590 = vmatprep.subr.mxu0 %v486
        %591 = vmatpush1.msra.mxu0 %v485
        %592 = vmatprep.subr.mxu0 0.0
        %593 = vmatpush1.msra.mxu0 0.0
        %594 = vmatprep.subr.mxu0 0.0
        %595 = vmatpush1.msra.mxu0 0.0
        %596 = vmatprep.subr.mxu0 0.0
        %597 = vmatpush1.msra.mxu0 0.0
        %598 = vmatprep.subr.mxu0 0.0
        %599 = vmatpush1.msra.mxu0 0.0
        %600 = vmatprep.subr.mxu0 0.0
        %601 = vmatpush1.msra.mxu0 0.0
        %602 = vmatprep.subr.mxu0 0.0
        %603 = vmatpush1.msra.mxu0 0.0
        %604 = vmatprep.subr.mxu0 0.0
        %605 = vmatpush1.msra.mxu0 0.0
        %606 = vmatprep.subr.mxu0 0.0
        %607 = vmatpush1.msra.mxu0 0.0
        %608 = vmatprep.subr.mxu0 0.0
        %609 = vmatpush1.msra.mxu0 0.0
        %610 = vmatprep.subr.mxu0 0.0
        %611 = vmatpush1.msra.mxu0 0.0
        %612 = vmatprep.subr.mxu0 0.0
        %613 = vmatpush1.msra.mxu0 0.0
        %614 = vmatprep.subr.mxu0 0.0
        %615 = vmatpush1.msra.mxu0 0.0
        %616 = vmatprep.subr.mxu0 0.0
        %617 = vmatpush1.msra.mxu0 0.0
        %618 = vmatprep.subr.mxu0 0.0
        %619 = vmatpush1.msra.mxu0 0.0
        %620 = vmatprep.subr.mxu0 0.0
        %621 = vmatpush1.msra.mxu0 0.0
        %622 = vmatprep.subr.mxu0 0.0
        %623 = vmatpush1.msra.mxu0 0.0
        %624 = vmatprep.mubr.f32.mxu0 0.0
        %625 = vmatmul.mubr.f32.gmra.mrb[0].mxu0 %v279
        %v626 = vpop.f32.mrb[0].mxu0
        %v627 = vadd.f32 0.0, %v626
        %v628 = vpop.f32.mrb[0].mxu0
        %v629 = vadd.f32 0.0, %v628
        %630 = vdwg.mxu0
        %631 = vmatprep.subr.mxu0 %v360
        %632 = vmatpush1.msra.mxu0 %v359
        %633 = vmatprep.subr.mxu0 %v364
        %634 = vmatpush1.msra.mxu0 %v363
        %635 = vmatprep.subr.mxu0 %v368
        %636 = vmatpush1.msra.mxu0 %v367
        %637 = vmatprep.subr.mxu0 %v372
        %638 = vmatpush1.msra.mxu0 %v371
        %639 = vmatprep.subr.mxu0 %v376
        %640 = vmatpush1.msra.mxu0 %v375
        %641 = vmatprep.subr.mxu0 %v380
        %642 = vmatpush1.msra.mxu0 %v379
        %643 = vmatprep.subr.mxu0 %v384
        %644 = vmatpush1.msra.mxu0 %v383
        %645 = vmatprep.subr.mxu0 %v388
        %646 = vmatpush1.msra.mxu0 %v387
        %647 = vmatprep.subr.mxu0 %v392
        %648 = vmatpush1.msra.mxu0 %v391
        %649 = vmatprep.subr.mxu0 %v396
        %650 = vmatpush1.msra.mxu0 %v395
        %651 = vmatprep.subr.mxu0 %v400
        %652 = vmatpush1.msra.mxu0 %v399
        %653 = vmatprep.subr.mxu0 %v404
        %654 = vmatpush1.msra.mxu0 %v403
        %655 = vmatprep.subr.mxu0 %v408
        %656 = vmatpush1.msra.mxu0 %v407
        %657 = vmatprep.subr.mxu0 %v412
        %658 = vmatpush1.msra.mxu0 %v411
        %659 = vmatprep.subr.mxu0 %v416
        %660 = vmatpush1.msra.mxu0 %v415
        %661 = vmatprep.subr.mxu0 %v420
        %662 = vmatpush1.msra.mxu0 %v419
        %663 = vmatprep.subr.mxu0 0.0
        %664 = vmatpush1.msra.mxu0 0.0
        %665 = vmatprep.subr.mxu0 0.0
        %666 = vmatpush1.msra.mxu0 0.0
        %667 = vmatprep.subr.mxu0 0.0
        %668 = vmatpush1.msra.mxu0 0.0
        %669 = vmatprep.subr.mxu0 0.0
        %670 = vmatpush1.msra.mxu0 0.0
        %671 = vmatprep.subr.mxu0 0.0
        %672 = vmatpush1.msra.mxu0 0.0
        %673 = vmatprep.subr.mxu0 0.0
        %674 = vmatpush1.msra.mxu0 0.0
        %675 = vmatprep.subr.mxu0 0.0
        %676 = vmatpush1.msra.mxu0 0.0
        %677 = vmatprep.subr.mxu0 0.0
        %678 = vmatpush1.msra.mxu0 0.0
        %679 = vmatprep.subr.mxu0 0.0
        %680 = vmatpush1.msra.mxu0 0.0
        %681 = vmatprep.subr.mxu0 0.0
        %682 = vmatpush1.msra.mxu0 0.0
        %683 = vmatprep.subr.mxu0 0.0
        %684 = vmatpush1.msra.mxu0 0.0
        %685 = vmatprep.subr.mxu0 0.0
        %686 = vmatpush1.msra.mxu0 0.0
        %687 = vmatprep.subr.mxu0 0.0
        %688 = vmatpush1.msra.mxu0 0.0
        %689 = vmatprep.subr.mxu0 0.0
        %690 = vmatpush1.msra.mxu0 0.0
        %691 = vmatprep.subr.mxu0 0.0
        %692 = vmatpush1.msra.mxu0 0.0
        %693 = vmatprep.subr.mxu0 0.0
        %694 = vmatpush1.msra.mxu0 0.0
        %695 = vmatprep.mubr.f32.mxu0 0.0
        %696 = vmatmul.mubr.f32.gmra.mrb[0].mxu0 %v358
        %v697 = vpop.f32.mrb[0].mxu0
        %v698 = vadd.f32 %v556, %v697
        %v699 = vpop.f32.mrb[0].mxu0
        %v700 = vadd.f32 %v558, %v699
        %701 = vdwg.mxu0
        %702 = vmatprep.subr.mxu0 %v362
        %703 = vmatpush1.msra.mxu0 %v361
        %704 = vmatprep.subr.mxu0 %v366
        %705 = vmatpush1.msra.mxu0 %v365
        %706 = vmatprep.subr.mxu0 %v370
        %707 = vmatpush1.msra.mxu0 %v369
        %708 = vmatprep.subr.mxu0 %v374
        %709 = vmatpush1.msra.mxu0 %v373
        %710 = vmatprep.subr.mxu0 %v378
        %711 = vmatpush1.msra.mxu0 %v377
        %712 = vmatprep.subr.mxu0 %v382
        %713 = vmatpush1.msra.mxu0 %v381
        %714 = vmatprep.subr.mxu0 %v386
        %715 = vmatpush1.msra.mxu0 %v385
        %716 = vmatprep.subr.mxu0 %v390
        %717 = vmatpush1.msra.mxu0 %v389
        %718 = vmatprep.subr.mxu0 %v394
        %719 = vmatpush1.msra.mxu0 %v393
        %720 = vmatprep.subr.mxu0 %v398
        %721 = vmatpush1.msra.mxu0 %v397
        %722 = vmatprep.subr.mxu0 %v402
        %723 = vmatpush1.msra.mxu0 %v401
        %724 = vmatprep.subr.mxu0 %v406
        %725 = vmatpush1.msra.mxu0 %v405
        %726 = vmatprep.subr.mxu0 %v410
        %727 = vmatpush1.msra.mxu0 %v409
        %728 = vmatprep.subr.mxu0 %v414
        %729 = vmatpush1.msra.mxu0 %v413
        %730 = vmatprep.subr.mxu0 %v418
        %731 = vmatpush1.msra.mxu0 %v417
        %732 = vmatprep.subr.mxu0 %v422
        %733 = vmatpush1.msra.mxu0 %v421
        %734 = vmatprep.subr.mxu0 0.0
        %735 = vmatpush1.msra.mxu0 0.0
        %736 = vmatprep.subr.mxu0 0.0
        %737 = vmatpush1.msra.mxu0 0.0
        %738 = vmatprep.subr.mxu0 0.0
        %739 = vmatpush1.msra.mxu0 0.0
        %740 = vmatprep.subr.mxu0 0.0
        %741 = vmatpush1.msra.mxu0 0.0
        %742 = vmatprep.subr.mxu0 0.0
        %743 = vmatpush1.msra.mxu0 0.0
        %744 = vmatprep.subr.mxu0 0.0
        %745 = vmatpush1.msra.mxu0 0.0
        %746 = vmatprep.subr.mxu0 0.0
        %747 = vmatpush1.msra.mxu0 0.0
        %748 = vmatprep.subr.mxu0 0.0
        %749 = vmatpush1.msra.mxu0 0.0
        %750 = vmatprep.subr.mxu0 0.0
        %751 = vmatpush1.msra.mxu0 0.0
        %752 = vmatprep.subr.mxu0 0.0
        %753 = vmatpush1.msra.mxu0 0.0
        %754 = vmatprep.subr.mxu0 0.0
        %755 = vmatpush1.msra.mxu0 0.0
        %756 = vmatprep.subr.mxu0 0.0
        %757 = vmatpush1.msra.mxu0 0.0
        %758 = vmatprep.subr.mxu0 0.0
        %759 = vmatpush1.msra.mxu0 0.0
        %760 = vmatprep.subr.mxu0 0.0
        %761 = vmatpush1.msra.mxu0 0.0
        %762 = vmatprep.subr.mxu0 0.0
        %763 = vmatpush1.msra.mxu0 0.0
        %764 = vmatprep.subr.mxu0 0.0
        %765 = vmatpush1.msra.mxu0 0.0
        %766 = vmatprep.mubr.f32.mxu0 0.0
        %767 = vmatmul.mubr.f32.gmra.mrb[0].mxu0 %v358
        %v768 = vpop.f32.mrb[0].mxu0
        %v769 = vadd.f32 %v627, %v768
        %v770 = vpop.f32.mrb[0].mxu0
        %v771 = vadd.f32 %v629, %v770
        %772 = vdwg.mxu0
        %v774 = vlaneseq
        %v775 = vshrl.u32 %v774, 7
        %v776 = vsub.s32 0, %v775
        %v777 = vrot.slane %v488, %v776
        %v778 = vlaneseq
        %v779 = vshrl.u32 %v778, 7
        %v780 = vsub.s32 1, %v779
        %v781 = vrot.slane %v488, %v780
        %v782 = vlaneseq
        %v783 = vshrl.u32 %v782, 7
        %v784 = vsub.s32 2, %v783
        %v785 = vrot.slane %v488, %v784
        %v786 = vlaneseq
        %v787 = vshrl.u32 %v786, 7
        %v788 = vsub.s32 3, %v787
        %v789 = vrot.slane %v488, %v788
        %v794 = vadd.f32 %v698, %v777
        %v795 = vadd.f32 %v700, %v781
        %v796 = vadd.f32 %v769, %v785
        %v797 = vadd.f32 %v771, %v789
        %v798 = vxor.u32 %v794, 2147483648
        %v799 = vmul.f32 %v798, 1.442695
        %v800 = vpow.pop %v799
        %v801 = vadd.f32 %v800, 1.0
        %v802 = vrcp.pop %v801
        %v803 = vmul.f32 1.0, %v802
        %v804 = vxor.u32 %v795, 2147483648
        %v805 = vmul.f32 %v804, 1.442695
        %v806 = vpow.pop %v805
        %v807 = vadd.f32 %v806, 1.0
        %v808 = vrcp.pop %v807
        %v809 = vmul.f32 1.0, %v808
        %v810 = vmul.f32 %v803, %v797
        %v811 = vadd.f32 %v796, %v810
        %v812 = vtanh.pop %v811
        %v813 = vsub.f32 1.0, %v809
        %v814 = vmul.f32 %v813, %v812
        %v815 = vmul.f32 %v809, %v279
        %v816 = vadd.f32 %v814, %v815
        %817 = vst [vmem:[%s272] sm:$0xff] %v816
        %v818 = vld [vmem:[#allocation5 + $0x480] sm:$0xff]
        %v819 = vld [vmem:[#allocation5 + $0x4a0] sm:$0xff]
        %v820 = vld [vmem:[#allocation5 + $0x4c0] sm:$0xff]
        %v821 = vld [vmem:[#allocation5 + $0x4e0] sm:$0xff]
        %v822 = vld [vmem:[#allocation5 + $0x500] sm:$0xff]
        %v823 = vld [vmem:[#allocation5 + $0x520] sm:$0xff]
        %v824 = vld [vmem:[#allocation5 + $0x540] sm:$0xff]
        %v825 = vld [vmem:[#allocation5 + $0x560] sm:$0xff]
        %v826 = vld [vmem:[#allocation5 + $0x580] sm:$0xff]
        %v827 = vld [vmem:[#allocation5 + $0x5a0] sm:$0xff]
        %v828 = vld [vmem:[#allocation5 + $0x5c0] sm:$0xff]
        %v829 = vld [vmem:[#allocation5 + $0x5e0] sm:$0xff]
        %v830 = vld [vmem:[#allocation5 + $0x600] sm:$0xff]
        %v831 = vld [vmem:[#allocation5 + $0x620] sm:$0xff]
        %v832 = vld [vmem:[#allocation5 + $0x640] sm:$0xff]
        %v833 = vld [vmem:[#allocation5 + $0x660] sm:$0xff]
        %v834 = vld [vmem:[#allocation5 + $0x680] ss:$0 sm:$0xff]
        %835 = vmatprep.subr.mxu0 0.0
        %836 = vmatpush1.msra.mxu0 %v818
        %837 = vmatprep.subr.mxu0 0.0
        %838 = vmatpush1.msra.mxu0 %v819
        %839 = vmatprep.subr.mxu0 0.0
        %840 = vmatpush1.msra.mxu0 %v820
        %841 = vmatprep.subr.mxu0 0.0
        %842 = vmatpush1.msra.mxu0 %v821
        %843 = vmatprep.subr.mxu0 0.0
        %844 = vmatpush1.msra.mxu0 %v822
        %845 = vmatprep.subr.mxu0 0.0
        %846 = vmatpush1.msra.mxu0 %v823
        %847 = vmatprep.subr.mxu0 0.0
        %848 = vmatpush1.msra.mxu0 %v824
        %849 = vmatprep.subr.mxu0 0.0
        %850 = vmatpush1.msra.mxu0 %v825
        %851 = vmatprep.subr.mxu0 0.0
        %852 = vmatpush1.msra.mxu0 %v826
        %853 = vmatprep.subr.mxu0 0.0
        %854 = vmatpush1.msra.mxu0 %v827
        %855 = vmatprep.subr.mxu0 0.0
        %856 = vmatpush1.msra.mxu0 %v828
        %857 = vmatprep.subr.mxu0 0.0
        %858 = vmatpush1.msra.mxu0 %v829
        %859 = vmatprep.subr.mxu0 0.0
        %860 = vmatpush1.msra.mxu0 %v830
        %861 = vmatprep.subr.mxu0 0.0
        %862 = vmatpush1.msra.mxu0 %v831
        %863 = vmatprep.subr.mxu0 0.0
        %864 = vmatpush1.msra.mxu0 %v832
        %865 = vmatprep.subr.mxu0 0.0
        %866 = vmatpush1.msra.mxu0 %v833
        %867 = vmatprep.subr.mxu0 0.0
        %868 = vmatpush1.msra.mxu0 0.0
        %869 = vmatprep.subr.mxu0 0.0
        %870 = vmatpush1.msra.mxu0 0.0
        %871 = vmatprep.subr.mxu0 0.0
        %872 = vmatpush1.msra.mxu0 0.0
        %873 = vmatprep.subr.mxu0 0.0
        %874 = vmatpush1.msra.mxu0 0.0
        %875 = vmatprep.subr.mxu0 0.0
        %876 = vmatpush1.msra.mxu0 0.0
        %877 = vmatprep.subr.mxu0 0.0
        %878 = vmatpush1.msra.mxu0 0.0
        %879 = vmatprep.subr.mxu0 0.0
        %880 = vmatpush1.msra.mxu0 0.0
        %881 = vmatprep.subr.mxu0 0.0
        %882 = vmatpush1.msra.mxu0 0.0
        %883 = vmatprep.subr.mxu0 0.0
        %884 = vmatpush1.msra.mxu0 0.0
        %885 = vmatprep.subr.mxu0 0.0
        %886 = vmatpush1.msra.mxu0 0.0
        %887 = vmatprep.subr.mxu0 0.0
        %888 = vmatpush1.msra.mxu0 0.0
        %889 = vmatprep.subr.mxu0 0.0
        %890 = vmatpush1.msra.mxu0 0.0
        %891 = vmatprep.subr.mxu0 0.0
        %892 = vmatpush1.msra.mxu0 0.0
        %893 = vmatprep.subr.mxu0 0.0
        %894 = vmatpush1.msra.mxu0 0.0
        %895 = vmatprep.subr.mxu0 0.0
        %896 = vmatpush1.msra.mxu0 0.0
        %897 = vmatprep.subr.mxu0 0.0
        %898 = vmatpush1.msra.mxu0 0.0
        %899 = vmatprep.mubr.f32.mxu0 0.0
        %900 = vmatmul.mubr.f32.gmra.mrb[0].mxu0 %v816
        %v901 = vpop.f32.mrb[0].mxu0
        %v902 = vadd.f32 %v834, %v901
        %v903 = vpop.f32.mrb[0].mxu0
        %904 = vdwg.mxu0
        %905 = vst [vmem:[%s258] sm:$0xff] %v902
        %s906 = sand.u32 %s120, 1
        %s907 = scalar_lea.sflag [#allocation4], %s906
        %s908 = sand.u32 %s120, 1
        %s909 = smul.addr %s908, 8
        %s910 = scalar_lea.vmem [#allocation7], %s909
        %p911 = scmp.lt.s32.totalorder %s27, 0
        %s912 = scalar_select %p911, %s27, 0
        %s913 = smul.addr %s912, 8
        %s914 = scalar_lea.vmem %s4, %s913
        // Predicated region
        $region45: #{forward.1} parent=31 // pred_check
          %p915 = pneg %p130
        $region46: #{forward.1} parent=31 // pred_check_branch
          %917 = sbr.rel (%p915) target = $region48
        $region47: #{forward.1} parent=31 // pred_region
          %s919 = ssub.s32 128, 128
          %920 = vsyncadd %s907, %s919
          %s921 = sadd.s32 %s27, %s28
          %s922 = smul.addr %s921, 128
          %s923 = scalar_lea.hbm %s3, %s922
          %s925 = sshll.u32 %s910, 4
          %s926 = int_to_ptr.vmem [resolvable:$true] %s925
          %928 = dma.vmem_to_hbm [thread:$0]  %s926, 128, %s923, %s907
        $region48: #{forward.1} parent=31 // pred_fallthru
          _
        // Predicated region
        $region49: #{forward.1} parent=31 // pred_check
          %p929 = pneg %p156
        $region50: #{forward.1} parent=31 // pred_check_branch
          %931 = sbr.rel (%p929) target = $region52
        $region51: #{forward.1} parent=31 // pred_region
          _
        $region52: #{forward.1} parent=31 // pred_fallthru
          _
        // Predicated region
        $region53: #{forward.1} parent=31 // pred_check
          %p932 = pneg %p156
        $region54: #{forward.1} parent=31 // pred_check_branch
          %934 = sbr.rel (%p932) target = $region56
        $region55: #{forward.1} parent=31 // pred_region
          %p935 = scmp.lt.s32.totalorder %s27, 0
          %s936 = scalar_select %p935, %s27, 0
          %s937 = smul.addr %s936, 8
          %s938 = scalar_lea.vmem %s4, %s937
        $region56: #{forward.1} parent=31 // pred_fallthru
          _
      $region32: #{forward.1} parent=5 // pred_fallthru
        _
      %p939 = scmp.le.s32.totalorder 2, %s18
      // Predicated region
      $region57: #{forward.1} parent=5 // pred_check
        %p940 = pneg %p939
      $region58: #{forward.1} parent=5 // pred_check_branch
        %942 = sbr.rel (%p940) target = $region60
      $region59: #{forward.1} parent=5 // pred_region
        %s943 = ssub.s32 %s18, 2
        // Predicated region
        $region61: #{forward.1} parent=59 // pred_check
          %p944 = pneg %p136
        $region62: #{forward.1} parent=59 // pred_check_branch
          %946 = sbr.rel (%p944) target = $region64
        $region63: #{forward.1} parent=59 // pred_region
          %s947 = sand.u32 %s121, 1
          %s948 = scalar_lea.sflag [#allocation4], %s947
          %s949 = sand.u32 %s121, 1
          %s950 = smul.addr %s949, 8
          %s951 = scalar_lea.vmem [#allocation7], %s950
          %952 = dma.done %s948, 128
        $region64: #{forward.1} parent=59 // pred_fallthru
          _
      $region60: #{forward.1} parent=5 // pred_fallthru
        _
    $region6: #{forward.1} parent=1 // loop_footer
      %s22 = sadd.s32 1, %s18
    $region7: #{forward.1} parent=1 // loop_footer_branch
      %17 = sbr.rel target = $region3
    $region8: #{forward.1} parent=1 // loop_exit
      _
    %953 = vsyncpa [#allocation3], 1
    %s954 = scalar_lea.sflag [#allocation3], 1
    %955 = vsyncpa %s954, 1
    %956 = vsyncpa [#allocation6], 1
    %957 = vsyncpa [#allocation4], 1
    %s958 = scalar_lea.sflag [#allocation4], 1
    %959 = vsyncpa %s958, 1

</llo_original>
